<compile_context>
chip_gen: v7x
topology: tpu7x:2x2x1
jax: 0.10.0
libtpu: 0.0.40
codegen_flags: <defaults>
</compile_context>

<pallas_src>
import functools

import jax
import jax.numpy as jnp
from jax.experimental import pallas as pl
from jax.experimental.pallas import tpu as pltpu

_MATMUL_DTYPE = jnp.bfloat16  # MXU operand dtype (accumulation is always f32)


def _round_up(x, m):
    return (x + m - 1) // m * m


def _fc_ce_kernel(num_classes, f_ref, w_ref, b_ref, lab_ref, loss_ref):
    """Fused fc + numerically-stable cross entropy for one (TM, C_in) row tile.

    f_ref:   (TM, C_in)    bf16
    w_ref:   (C_in, C_pad) bf16   (VMEM-resident across the whole grid)
    b_ref:   (1, C_pad)    f32
    lab_ref: (TM, 1)       int32  (-1 marks padded rows)
    loss_ref:(TM, 1)       f32    per-sample CE (0 for padded rows)
    """
    # logits = f @ W + b   (MXU, f32 accumulation)
    logits = jnp.dot(f_ref[...], w_ref[...], preferred_element_type=jnp.float32)
    logits = logits + b_ref[...]  # (1, C_pad) broadcast, already f32

    # Mask the padded class columns before the softmax reduction.
    cls_ids = jax.lax.broadcasted_iota(jnp.int32, logits.shape, 1)
    logits = jnp.where(cls_ids < num_classes, logits, jnp.float32(-1e30))

    # Stable log-sum-exp over classes.
    m = jnp.max(logits, axis=-1, keepdims=True)
    lse = jnp.log(jnp.sum(jnp.exp(logits - m), axis=-1, keepdims=True)) + m

    # Gather the target logit via one-hot (labels live in a (TM,1) VMEM block).
    lab = lab_ref[...]
    onehot = (cls_ids == lab).astype(jnp.float32)
    target = jnp.sum(onehot * logits, axis=-1, keepdims=True)

    # Zero out contributions from padded batch rows (label == -1).
    valid = (lab >= 0).astype(jnp.float32)
    loss_ref[...] = (lse - target) * valid


@functools.partial(jax.jit, static_argnames=("num_classes",))
def _fc_ce_pallas(f, w_pad, b_pad, labels, *, num_classes):
    """Returns mean cross-entropy of (f @ W + b) vs labels, fused in Pallas."""
    n, c_in = f.shape
    c_pad = w_pad.shape[1]

    # Batch tiling: TM multiple of 8, capped at 256; pad N up to a multiple of TM.
    tm = min(256, _round_up(n, 8))
    n_pad = _round_up(n, tm)

    f_p = f.astype(_MATMUL_DTYPE)
    lab = labels.astype(jnp.int32)
    if n_pad != n:
        f_p = jnp.pad(f_p, ((0, n_pad - n), (0, 0)))
        lab = jnp.pad(lab, (0, n_pad - n), constant_values=-1)
    lab2d = lab.reshape(n_pad, 1)

    w_mm = w_pad.astype(_MATMUL_DTYPE)
    b2d = b_pad.astype(jnp.float32).reshape(1, c_pad)

    grid = (n_pad // tm,)
    kernel = functools.partial(_fc_ce_kernel, num_classes)

    bytes_accessed = (
        n_pad * c_in * 2        # f (bf16)
        + c_in * c_pad * 2      # W (bf16)
        + c_pad * 4             # bias
        + n_pad * 4             # labels
        + n_pad * 4             # per-sample loss out
    )

    per_sample_loss = pl.pallas_call(
        kernel,
        out_shape=jax.ShapeDtypeStruct((n_pad, 1), jnp.float32),
        grid_spec=pltpu.PrefetchScalarGridSpec(
            num_scalar_prefetch=0,
            grid=grid,
            in_specs=[
                pl.BlockSpec((tm, c_in), lambda i: (i, 0)),      # f row tile
                pl.BlockSpec((c_in, c_pad), lambda i: (0, 0)),   # W, VMEM-resident
                pl.BlockSpec((1, c_pad), lambda i: (0, 0)),      # bias, VMEM-resident
                pl.BlockSpec((tm, 1), lambda i: (i, 0)),         # labels tile
            ],
            out_specs=pl.BlockSpec((tm, 1), lambda i: (i, 0)),   # per-sample loss tile
        ),
        compiler_params=pltpu.CompilerParams(
            dimension_semantics=("parallel",),
        ),
        cost_estimate=pl.CostEstimate(
            flops=2 * n_pad * c_in * c_pad,
            transcendentals=n_pad * c_pad,
            bytes_accessed=bytes_accessed,
        ),
    )(f_p, w_mm, b2d, lab2d)

    # Padded rows contribute exactly 0, so sum / n == mean over the real batch.
    return jnp.sum(per_sample_loss) / jnp.float32(n)


class LinearNeck:
    """JAX/Pallas port of mmaction `Linear` neck (CrossEntropyLoss head)."""

    def __init__(self, num_classes, in_channels, init_std=0.02, key=None):
        self.num_classes = num_classes
        self.in_channels = in_channels
        self.init_std = init_std
        if key is None:
            key = jax.random.PRNGKey(0)
        wkey, _ = jax.random.split(key)

        # trunc_normal_init(fc_cls, std=init_std): weight ~ trunc-normal(std), bias = 0
        w_pt = (
            jax.random.truncated_normal(
                wkey, -2.0, 2.0, (num_classes, in_channels), jnp.float32
            )
            * init_std
        )
        # Store transposed for the kernel: (in_channels, num_classes).
        self.weight = jnp.transpose(w_pt)
        self.bias = jnp.zeros((num_classes,), jnp.float32)

        # Lane-dense padded copies for the kernel (classes padded to multiple of 128,
        # padded weight columns / bias entries are zero; padded logits masked in-kernel).
        c_pad = _round_up(num_classes, 128)
        self._weight_padded = jnp.pad(
            self.weight, ((0, 0), (0, c_pad - num_classes))
        )
        self._bias_padded = jnp.pad(self.bias, (0, c_pad - num_classes))

    def forward(self, f, labels=None, domains=None, **kwargs):
        if labels is not None:
            loss = _fc_ce_pallas(
                f,
                self._weight_padded,
                self._bias_padded,
                labels,
                num_classes=self.num_classes,
            )
            return (f, {"loss_cls": loss})
        else:
            return (f, {})


if __name__ == "__main__":
    key = jax.random.PRNGKey(0)
    k_f, k_lab, k_param = jax.random.split(key, 3)

    batch = 8
    in_channels = 32
    num_classes = 16

    neck = LinearNeck(num_classes=num_classes, in_channels=in_channels, key=k_param)

    f = jax.random.normal(k_f, (batch, in_channels), jnp.float32)
    labels = jax.random.randint(k_lab, (batch,), 0, num_classes, jnp.int32)

    # Path without labels: identity passthrough, empty dict.
    f_out0, losses0 = neck.forward(f)
    assert losses0 == {}

    # Path with labels: fused Pallas fc + cross-entropy.
    f_out, losses = neck.forward(f, labels=labels)
    jax.block_until_ready(f_out)
    jax.block_until_ready(losses["loss_cls"])

    # Reference with the same bf16 matmul operands (f32 accumulation + f32 softmax).
    logits_ref = (
        jnp.dot(
            f.astype(_MATMUL_DTYPE),
            neck.weight.astype(_MATMUL_DTYPE),
            preferred_element_type=jnp.float32,
        )
        + neck.bias
    )
    ce_ref = jnp.mean(
        jax.nn.logsumexp(logits_ref, axis=-1)
        - jnp.take_along_axis(logits_ref, labels[:, None], axis=-1)[:, 0]
    )
    assert jnp.allclose(losses["loss_cls"], ce_ref, atol=1e-4, rtol=1e-4), (
        losses["loss_cls"],
        ce_ref,
    )
    assert jnp.array_equal(f_out, f)

    print("KERNEL_OK")
</pallas_src>

<mosaic_0001>
module attributes {stable_mosaic.version = 11 : i64} {
  func.func @_fc_ce_kernel(%arg0: i32, %arg1: memref<8x32xbf16, #tpu.memory_space<vmem>>, %arg2: memref<32x128xbf16, #tpu.memory_space<vmem>>, %arg3: memref<1x128xf32, #tpu.memory_space<vmem>>, %arg4: memref<8x1xi32, #tpu.memory_space<vmem>>, %arg5: memref<8x1xf32, #tpu.memory_space<vmem>>) attributes {dimension_semantics = [#tpu.dimension_semantics<parallel>], iteration_bounds = array<i64: 1>, scalar_prefetch = 0 : i64, scratch_operands = 0 : i64, tpu.core_type = #tpu.core_type<tc>, window_params = [{transform_indices = @transform_0, window_bounds = array<i64: 8, 32>}, {pipeline_mode = #tpu.pipeline_mode<synchronous>, transform_indices = @transform_1, window_bounds = array<i64: 32, 128>}, {pipeline_mode = #tpu.pipeline_mode<synchronous>, transform_indices = @transform_2, window_bounds = array<i64: 1, 128>}, {transform_indices = @transform_3, window_bounds = array<i64: 8, 1>}, {transform_indices = @transform_4, window_bounds = array<i64: 8, 1>}]} {
    %c0 = arith.constant 0 : index
    %c0_0 = arith.constant 0 : index
    %0 = vector.load %arg1[%c0, %c0_0] : memref<8x32xbf16, #tpu.memory_space<vmem>>, vector<8x32xbf16>
    %c0_1 = arith.constant 0 : index
    %c0_2 = arith.constant 0 : index
    %1 = vector.load %arg2[%c0_1, %c0_2] : memref<32x128xbf16, #tpu.memory_space<vmem>>, vector<32x128xbf16>
    %cst = arith.constant dense<0.000000e+00> : vector<8x128xf32>
    %2 = tpu.matmul %0, %1, %cst {dimension_numbers = #tpu.dot_dimension_numbers<[1], [0], [0], [1], [0, 0, 1, 1], [], []>} : vector<8x32xbf16>, vector<32x128xbf16>, vector<8x128xf32> -> vector<8x128xf32>
    %c0_3 = arith.constant 0 : index
    %c0_4 = arith.constant 0 : index
    %3 = vector.load %arg3[%c0_3, %c0_4] : memref<1x128xf32, #tpu.memory_space<vmem>>, vector<1x128xf32>
    %4 = vector.broadcast %3 : vector<1x128xf32> to vector<8x128xf32>
    %5 = arith.addf %2, %4 : vector<8x128xf32>
    %6 = tpu.iota {dimensions = array<i32: 1>} : vector<8x128xi32>
    %c16_i32 = arith.constant 16 : i32
    %7 = vector.broadcast %c16_i32 : i32 to vector<8x128xi32>
    %8 = arith.cmpi slt, %6, %7 : vector<8x128xi32>
    %cst_5 = arith.constant -1.000000e+30 : f32
    %9 = vector.broadcast %cst_5 : f32 to vector<8x128xf32>
    %10 = arith.select %8, %5, %9 : vector<8x128xi1>, vector<8x128xf32>
    %cst_6 = arith.constant dense<0xFF800000> : vector<8xf32>
    %11 = vector.multi_reduction <maximumf>, %10, %cst_6 [1] : vector<8x128xf32> to vector<8xf32>
    %12 = vector.shape_cast %11 : vector<8xf32> to vector<8x1xf32>
    %13 = vector.broadcast %12 : vector<8x1xf32> to vector<8x128xf32>
    %14 = arith.subf %10, %13 : vector<8x128xf32>
    %15 = math.exp %14 : vector<8x128xf32>
    %cst_7 = arith.constant dense<0.000000e+00> : vector<8xf32>
    %16 = vector.multi_reduction <add>, %15, %cst_7 [1] : vector<8x128xf32> to vector<8xf32>
    %17 = vector.shape_cast %16 : vector<8xf32> to vector<8x1xf32>
    %18 = math.log %17 : vector<8x1xf32>
    %19 = arith.addf %18, %12 : vector<8x1xf32>
    %c0_8 = arith.constant 0 : index
    %c0_9 = arith.constant 0 : index
    %20 = vector.load %arg4[%c0_8, %c0_9] : memref<8x1xi32, #tpu.memory_space<vmem>>, vector<8x1xi32>
    %21 = vector.broadcast %20 : vector<8x1xi32> to vector<8x128xi32>
    %22 = arith.cmpi eq, %6, %21 : vector<8x128xi32>
    %23 = arith.extui %22 : vector<8x128xi1> to vector<8x128xi32>
    %24 = arith.sitofp %23 : vector<8x128xi32> to vector<8x128xf32>
    %25 = arith.mulf %24, %10 : vector<8x128xf32>
    %cst_10 = arith.constant dense<0.000000e+00> : vector<8xf32>
    %26 = vector.multi_reduction <add>, %25, %cst_10 [1] : vector<8x128xf32> to vector<8xf32>
    %27 = vector.shape_cast %26 : vector<8xf32> to vector<8x1xf32>
    %c0_i32 = arith.constant 0 : i32
    %28 = vector.broadcast %c0_i32 : i32 to vector<8x1xi32>
    %29 = arith.cmpi sge, %20, %28 : vector<8x1xi32>
    %30 = arith.extui %29 : vector<8x1xi1> to vector<8x1xi32>
    %31 = arith.sitofp %30 : vector<8x1xi32> to vector<8x1xf32>
    %32 = arith.subf %19, %27 : vector<8x1xf32>
    %33 = arith.mulf %32, %31 : vector<8x1xf32>
    %c0_11 = arith.constant 0 : index
    %c0_12 = arith.constant 0 : index
    %34 = vector.load %arg5[%c0_11, %c0_12] : memref<8x1xf32, #tpu.memory_space<vmem>>, vector<8x1xf32>
    tpu.vector_store %arg5[%c0_11, %c0_12], %33 {strides = array<i32>} : memref<8x1xf32, #tpu.memory_space<vmem>>, vector<8x1xf32>,
    return
  }
  func.func @transform_0(%arg0: i32) -> (i32, i32) {
    %c0_i32 = arith.constant 0 : i32
    %c0_i32_0 = arith.constant 0 : i32
    return %arg0, %c0_i32 : i32, i32
  }
  func.func @transform_1(%arg0: i32) -> (i32, i32) {
    %c0_i32 = arith.constant 0 : i32
    %c0_i32_0 = arith.constant 0 : i32
    %c0_i32_1 = arith.constant 0 : i32
    return %c0_i32, %c0_i32_0 : i32, i32
  }
  func.func @transform_2(%arg0: i32) -> (i32, i32) {
    %c0_i32 = arith.constant 0 : i32
    %c0_i32_0 = arith.constant 0 : i32
    %c0_i32_1 = arith.constant 0 : i32
    return %c0_i32, %c0_i32_0 : i32, i32
  }
  func.func @transform_3(%arg0: i32) -> (i32, i32) {
    %c0_i32 = arith.constant 0 : i32
    %c0_i32_0 = arith.constant 0 : i32
    return %arg0, %c0_i32 : i32, i32
  }
  func.func @transform_4(%arg0: i32) -> (i32, i32) {
    %c0_i32 = arith.constant 0 : i32
    %c0_i32_0 = arith.constant 0 : i32
    return %arg0, %c0_i32 : i32, i32
  }
}

</mosaic_0001>

<llo_original>
// kernel: _fc_ce_pallas.1
$region0: #{_fc_ce_pallas.1}
  #allocation0 [shape = 'u32[]', space=smem, size = 0x4, offset = 0x4, fixed_abs, tag = 'smem constant byte address 0x4 - core index']
  #allocation1 [shape = 'u32[144,128]{1,0:T(1,128)}', space=vmem, size = 0x12000, scoped, tag = 'internal scratch']
  %s0 = inlined_call_operand.vmem [shape: bf16[8,32], index: 0, kind: input, shape index: {}]
  %s1 = inlined_call_operand.vmem [shape: bf16[32,128], index: 1, kind: input, shape index: {}]
  %s2 = inlined_call_operand.vmem [shape: f32[1,128], index: 2, kind: input, shape index: {}]
  %s3 = inlined_call_operand.vmem [shape: s32[8,1], index: 3, kind: input, shape index: {}]
  %s4 = inlined_call_operand.vmem [shape: f32[8,1], index: 4, kind: output, shape index: {}]
  %s5 = sld [smem:[#allocation0]]
  $region26: #{_fc_ce_pallas.1} parent=0
    _
  %s7 = ssub.s32 1, %s5
  %s8 = scalar_select 0, %s7, %s5
  // Predicated region
  $region2: #{_fc_ce_pallas.1} parent=0 // pred_check
    _
  $region3: #{_fc_ce_pallas.1} parent=0 // pred_check_branch
    %10 = sbr.rel (0) target = $region5
  $region4: #{_fc_ce_pallas.1} parent=0 // pred_region
    _
  $region5: #{_fc_ce_pallas.1} parent=0 // pred_fallthru
    _
  // Predicated region
  $region6: #{_fc_ce_pallas.1} parent=0 // pred_check
    _
  $region7: #{_fc_ce_pallas.1} parent=0 // pred_check_branch
    %12 = sbr.rel (0) target = $region9
  $region8: #{_fc_ce_pallas.1} parent=0 // pred_region
    _
  $region9: #{_fc_ce_pallas.1} parent=0 // pred_fallthru
    _
  // Predicated region
  $region10: #{_fc_ce_pallas.1} parent=0 // pred_check
    _
  $region11: #{_fc_ce_pallas.1} parent=0 // pred_check_branch
    %14 = sbr.rel (0) target = $region13
  $region12: #{_fc_ce_pallas.1} parent=0 // pred_region
    _
  $region13: #{_fc_ce_pallas.1} parent=0 // pred_fallthru
    _
  // Predicated region
  $region14: #{_fc_ce_pallas.1} parent=0 // pred_check
    _
  $region15: #{_fc_ce_pallas.1} parent=0 // pred_check_branch
    %16 = sbr.rel (0) target = $region17
  $region16: #{_fc_ce_pallas.1} parent=0 // pred_region
    _
  $region17: #{_fc_ce_pallas.1} parent=0 // pred_fallthru
    _
  %v18 = vld [vmem:[%s0] sm:$0xf]
  %v19 = vld [vmem:[%s1] sm:$0xf]
  %v20 = vld [vmem:[%s1 + $0x4] sm:$0xf]
  %v21 = vld [vmem:[%s1 + $0x8] sm:$0xf]
  %v22 = vld [vmem:[%s1 + $0xc] sm:$0xf]
  %v23 = vld [vmem:[%s2] sm:$0x1]
  %v25 = vlaneseq
  %v26 = vshrl.u32 %v25, 7
  %v27 = vsub.s32 0, %v26
  %v28 = vrot.slane %v23, %v27
  %v34 = vunpack.c.l.b16 %v19
  %v35 = vunpack.c.l.b16 %v20
  %v36 = vunpack.c.l.b16 %v21
  %v37 = vunpack.c.l.b16 %v22
  %v38 = vpack.c.b16 %v35, %v34
  %v39 = vpack.c.b16 %v37, %v36
  %vm42 = vcmask 261120
  %v44 = vsel %vm42, %v18, 0
  %46 = vmatprep.subr.bf16.mxu0 0
  %47 = vmatpush1.bf16.msra.mxu0 %v38
  %48 = vmatprep.subr.bf16.mxu0 0
  %49 = vmatpush1.bf16.msra.mxu0 %v39
  %50 = vmatprep.subr.bf16.mxu0 0
  %51 = vmatpush1.bf16.msra.mxu0 0
  %52 = vmatprep.subr.bf16.mxu0 0
  %53 = vmatpush1.bf16.msra.mxu0 0
  %54 = vmatprep.subr.bf16.mxu0 0
  %55 = vmatpush1.bf16.msra.mxu0 0
  %56 = vmatprep.subr.bf16.mxu0 0
  %57 = vmatpush1.bf16.msra.mxu0 0
  %58 = vmatprep.subr.bf16.mxu0 0
  %59 = vmatpush1.bf16.msra.mxu0 0
  %60 = vmatprep.subr.bf16.mxu0 0
  %61 = vmatpush1.bf16.msra.mxu0 0
  %62 = vmatprep.subr.bf16.mxu0 0
  %63 = vmatpush1.bf16.msra.mxu0 0
  %64 = vmatprep.subr.bf16.mxu0 0
  %65 = vmatpush1.bf16.msra.mxu0 0
  %66 = vmatprep.subr.bf16.mxu0 0
  %67 = vmatpush1.bf16.msra.mxu0 0
  %68 = vmatprep.subr.bf16.mxu0 0
  %69 = vmatpush1.bf16.msra.mxu0 0
  %70 = vmatprep.subr.bf16.mxu0 0
  %71 = vmatpush1.bf16.msra.mxu0 0
  %72 = vmatprep.subr.bf16.mxu0 0
  %73 = vmatpush1.bf16.msra.mxu0 0
  %74 = vmatprep.subr.bf16.mxu0 0
  %75 = vmatpush1.bf16.msra.mxu0 0
  %76 = vmatprep.subr.bf16.mxu0 0
  %77 = vmatpush1.bf16.msra.mxu0 0
  %78 = vmatprep.mubr.bf16.mxu0 0
  %79 = vmatmul.mubr.bf16.gmra.mrb[0].mxu0 %v44
  %v80 = vpop.f32.mrb[0].mxu0
  %v81 = vadd.f32 %v28, %v80
  %v82 = vpop.f32.mrb[0].mxu0
  %v83 = vpop.f32.mrb[0].mxu0
  %v84 = vpop.f32.mrb[0].mxu0
  %85 = vdwg.mxu0
  %v86 = vlaneseq
  %v87 = vand.u32 %v86, 127
  %vm88 = vcmp.lt.s32.totalorder %v87, 16
  %v89 = vsel %vm88, %v81, -1e+30
  %90 = vmax.xlane.f32.xlu0 %v89
  %v91 = vpop.xlane.xlu0 %90
  %v92 = vsub.f32 %v89, %v91
  %v93 = vmul.f32 %v92, 1.442695
  %v94 = vpow.pop %v93
  %95 = vadd.xlane.f32.xlu0 %v94
  %v96 = vpop.xlane.xlu0 %95
  %v97 = vlog2.pop %v96
  %v98 = vmul.f32 %v97, 0.6931472
  %v99 = vadd.f32 %v98, %v91
  %v100 = vld [vmem:[%s3] sm:$0xff]
  %101 = vset.pattern.permute.xlu0 0
  %102 = vperm.xlu0 %101, %v100
  %v103 = vpop.permute.xlu0 %102
  %vm104 = vcmp.eq.s32.totalorder %v87, %v103
  %v105 = vsel %vm104, 1, 0
  %v106 = vcvt.s32.f32 %v105
  %v107 = vmul.f32 %v106, %v89
  %108 = vadd.xlane.f32.xlu0 %v107
  %v109 = vpop.xlane.xlu0 %108
  %vm110 = vcmp.ge.s32.totalorder %v100, 0
  %v111 = vsel %vm110, 1, 0
  %v112 = vcvt.s32.f32 %v111
  %v113 = vsub.f32 %v99, %v109
  %v114 = vmul.f32 %v113, %v112
  %vm115 = vcmask 7168
  %116 = vst.msk [vmem:[%s4] sm:$0xff] %vm115, %v114
  // Predicated region
  $region18: #{_fc_ce_pallas.1} parent=0 // pred_check
    _
  $region19: #{_fc_ce_pallas.1} parent=0 // pred_check_branch
    %118 = sbr.rel (0) target = $region21
  $region20: #{_fc_ce_pallas.1} parent=0 // pred_region
    _
  $region21: #{_fc_ce_pallas.1} parent=0 // pred_fallthru
    _
  // Predicated region
  $region22: #{_fc_ce_pallas.1} parent=0 // pred_check
    _
  $region23: #{_fc_ce_pallas.1} parent=0 // pred_check_branch
    %120 = sbr.rel (0) target = $region25
  $region24: #{_fc_ce_pallas.1} parent=0 // pred_region
    _
  $region25: #{_fc_ce_pallas.1} parent=0 // pred_fallthru
    _

</llo_original>
